<compile_context>
chip_gen: v6e
topology: v6e:2x2x1
jax: 0.10.0
libtpu: 0.0.40
codegen_flags: <defaults>
</compile_context>

<pallas_src>
import functools

import jax
import jax.numpy as jnp
from jax import lax
from jax.experimental import pallas as pl
from jax.experimental.pallas import tpu as pltpu

BN_EPS = 1e-5
F_PAD = 128          # every feature dim (hidden, hidden/2, out) padded to 128 lanes
VEC_ROWS = 8         # each (1, F) vector parameter gets its own 8-row aligned block


def _round_up(x, m):
    return (x + m - 1) // m * m


def _bn_relu(h, gamma, beta):
    # BatchNorm1d training mode (biased batch variance), folded to a single FMA.
    mu = jnp.mean(h, axis=0, keepdims=True)
    var = jnp.maximum(jnp.mean(h * h, axis=0, keepdims=True) - mu * mu, 0.0)
    scale = gamma * lax.rsqrt(var + BN_EPS)          # rsqrt -> EUP slot
    shift = beta - mu * scale
    return jnp.maximum(h * scale + shift, 0.0)


def generator_kernel(s_ref, z_ref, slab_ref, out_ref, *, sd, zd):
    # Static, 8-sublane-aligned views into the packed parameter slab.
    off = 0
    w1s = slab_ref[off:off + sd, :];        off += sd
    w1z = slab_ref[off:off + zd, :];        off += zd
    g1  = slab_ref[off:off + 1, :];         off += VEC_ROWS
    be1 = slab_ref[off:off + 1, :];         off += VEC_ROWS
    w2  = slab_ref[off:off + F_PAD, :];     off += F_PAD
    g2  = slab_ref[off:off + 1, :];         off += VEC_ROWS
    be2 = slab_ref[off:off + 1, :];         off += VEC_ROWS
    w3  = slab_ref[off:off + F_PAD, :];     off += F_PAD
    b3  = slab_ref[off:off + 1, :]

    # Layer 1: fused-concat Linear (bias cancelled by BN) -> BN -> ReLU
    h1 = (jnp.dot(s_ref[...], w1s, preferred_element_type=jnp.float32)
          + jnp.dot(z_ref[...], w1z, preferred_element_type=jnp.float32))
    h1 = _bn_relu(h1, g1, be1)

    # Layer 2: Linear (bias cancelled by BN) -> BN -> ReLU
    h2 = jnp.dot(h1, w2, preferred_element_type=jnp.float32)
    h2 = _bn_relu(h2, g2, be2)

    # Layer 3: Linear (bias kept)
    out_ref[...] = (jnp.dot(h2, w3, preferred_element_type=jnp.float32)
                    + b3).astype(out_ref.dtype)


def _pad2(a, rows, cols):
    return jnp.zeros((rows, cols), jnp.float32).at[:a.shape[0], :a.shape[1]].set(a)


def pack_params(params, state_dim, z_dim):
    """Pack all generator parameters into one lane-dense (R, 128) f32 slab."""
    hidden = params["w1"].shape[1]
    half = params["w2"].shape[1]
    out_dim = params["w3"].shape[1]
    assert hidden <= F_PAD and half <= F_PAD and out_dim <= F_PAD

    sd = _round_up(state_dim, 8)
    zd = _round_up(z_dim, 8)

    w1 = params["w1"]
    pieces = [
        _pad2(w1[:state_dim], sd, F_PAD),      # w1_state
        _pad2(w1[state_dim:], zd, F_PAD),      # w1_noise
        _pad2(params["g1"],  VEC_ROWS, F_PAD),
        _pad2(params["be1"], VEC_ROWS, F_PAD),
        _pad2(params["w2"],  F_PAD, F_PAD),
        _pad2(params["g2"],  VEC_ROWS, F_PAD),
        _pad2(params["be2"], VEC_ROWS, F_PAD),
        _pad2(params["w3"],  F_PAD, F_PAD),
        _pad2(params["b3"],  VEC_ROWS, F_PAD),
    ]
    return jnp.concatenate(pieces, axis=0)


def _pad_cols(x, n):
    if x.shape[1] == n:
        return x
    return jnp.pad(x, ((0, 0), (0, n - x.shape[1])))


def generator_forward(state, noise, slab, *, state_dim, z_dim, out_dim):
    batch = state.shape[0]
    sd = _round_up(state_dim, 8)
    zd = _round_up(z_dim, 8)

    state_p = _pad_cols(state, sd)
    noise_p = _pad_cols(noise, zd)

    # Advisory cost hint (padded-dim upper bound).
    flops = 2 * batch * (sd * F_PAD + zd * F_PAD + F_PAD * F_PAD + F_PAD * F_PAD)
    bytes_accessed = 4 * (batch * sd + batch * zd
                          + slab.shape[0] * F_PAD + batch * F_PAD)
    cost = pl.CostEstimate(flops=flops,
                           transcendentals=2 * F_PAD,
                           bytes_accessed=bytes_accessed)

    # Whole problem fits in one VMEM tile -> single invocation, no grid,
    # every operand a full-extent VMEM block (no (8,128) divisibility issue).
    vmem_spec = pl.BlockSpec(memory_space=pltpu.VMEM)

    out_padded = pl.pallas_call(
        functools.partial(generator_kernel, sd=sd, zd=zd),
        out_shape=jax.ShapeDtypeStruct((batch, F_PAD), jnp.float32),
        in_specs=[vmem_spec, vmem_spec, vmem_spec],
        out_specs=vmem_spec,
        cost_estimate=cost,
    )(state_p, noise_p, slab)

    return out_padded[:, :out_dim]


def init_params(key, state_dim, z_dim, hidden_dim):
    """Deterministic synthetic init (PyTorch-like; weights stored as (in, out))."""
    in_dim = state_dim + z_dim
    half = hidden_dim // 2
    ks = jax.random.split(key, 6)

    def lin(kw, kb, fan_in, fan_out):
        bound = 1.0 / jnp.sqrt(float(fan_in))
        w = jax.random.uniform(kw, (fan_in, fan_out), jnp.float32, -bound, bound)
        b = jax.random.uniform(kb, (1, fan_out), jnp.float32, -bound, bound)
        return w, b

    w1, b1 = lin(ks[0], ks[1], in_dim, hidden_dim)
    w2, b2 = lin(ks[2], ks[3], hidden_dim, half)
    w3, b3 = lin(ks[4], ks[5], half, state_dim)

    return {
        "w1": w1, "b1": b1,
        "g1": jnp.ones((1, hidden_dim), jnp.float32),
        "be1": jnp.zeros((1, hidden_dim), jnp.float32),
        "w2": w2, "b2": b2,
        "g2": jnp.ones((1, half), jnp.float32),
        "be2": jnp.zeros((1, half), jnp.float32),
        "w3": w3, "b3": b3,
    }


def reference_forward(state, noise, params):
    # Faithful to the PyTorch module: concat, Linear WITH biases, BN train-mode.
    x = jnp.concatenate([state, noise], axis=-1)

    def bn_relu(h, g, b):
        mu = jnp.mean(h, axis=0, keepdims=True)
        var = jnp.mean((h - mu) ** 2, axis=0, keepdims=True)
        return jnp.maximum((h - mu) / jnp.sqrt(var + BN_EPS) * g + b, 0.0)

    h = bn_relu(x @ params["w1"] + params["b1"], params["g1"], params["be1"])
    h = bn_relu(h @ params["w2"] + params["b2"], params["g2"], params["be2"])
    return h @ params["w3"] + params["b3"]


if __name__ == "__main__":
    # Small shapes consistent with the module (state_dim, z_dim inputs; hidden MLP).
    batch, state_dim, z_dim, hidden_dim = 8, 16, 16, 32

    key = jax.random.PRNGKey(0)
    k_state, k_noise, k_params = jax.random.split(key, 3)

    state = jax.random.normal(k_state, (batch, state_dim), jnp.float32)
    noise = jax.random.normal(k_noise, (batch, z_dim), jnp.float32)
    params = init_params(k_params, state_dim, z_dim, hidden_dim)

    # Pack once (offline in a real training loop), reuse for every forward call.
    slab = pack_params(params, state_dim, z_dim)

    out = generator_forward(state, noise, slab,
                            state_dim=state_dim, z_dim=z_dim, out_dim=state_dim)
    out = jax.block_until_ready(out)

    ref = reference_forward(state, noise, params)
    assert out.shape == (batch, state_dim)
    assert jnp.max(jnp.abs(out - ref)) < 1e-4, "mismatch vs JAX reference"

    print("KERNEL_OK")
</pallas_src>

<mosaic_0001>
module attributes {stable_mosaic.version = 11 : i64} {
  func.func @generator_kernel(%arg0: memref<8x16xf32, #tpu.memory_space<vmem>>, %arg1: memref<8x16xf32, #tpu.memory_space<vmem>>, %arg2: memref<328x128xf32, #tpu.memory_space<vmem>>, %arg3: memref<8x128xf32, #tpu.memory_space<vmem>>) attributes {dimension_semantics = [], scalar_prefetch = 0 : i64, scratch_operands = 0 : i64, tpu.core_type = #tpu.core_type<tc>} {
    %c0 = arith.constant 0 : index
    %c0_0 = arith.constant 0 : index
    %0 = vector.load %arg2[%c0, %c0_0] : memref<328x128xf32, #tpu.memory_space<vmem>>, vector<16x128xf32>
    %c16 = arith.constant 16 : index
    %c0_1 = arith.constant 0 : index
    %1 = vector.load %arg2[%c16, %c0_1] : memref<328x128xf32, #tpu.memory_space<vmem>>, vector<16x128xf32>
    %c32 = arith.constant 32 : index
    %c0_2 = arith.constant 0 : index
    %2 = vector.load %arg2[%c32, %c0_2] : memref<328x128xf32, #tpu.memory_space<vmem>>, vector<1x128xf32>
    %c40 = arith.constant 40 : index
    %c0_3 = arith.constant 0 : index
    %3 = vector.load %arg2[%c40, %c0_3] : memref<328x128xf32, #tpu.memory_space<vmem>>, vector<1x128xf32>
    %c48 = arith.constant 48 : index
    %c0_4 = arith.constant 0 : index
    %4 = vector.load %arg2[%c48, %c0_4] : memref<328x128xf32, #tpu.memory_space<vmem>>, vector<128x128xf32>
    %c176 = arith.constant 176 : index
    %c0_5 = arith.constant 0 : index
    %5 = vector.load %arg2[%c176, %c0_5] : memref<328x128xf32, #tpu.memory_space<vmem>>, vector<1x128xf32>
    %c184 = arith.constant 184 : index
    %c0_6 = arith.constant 0 : index
    %6 = vector.load %arg2[%c184, %c0_6] : memref<328x128xf32, #tpu.memory_space<vmem>>, vector<1x128xf32>
    %c192 = arith.constant 192 : index
    %c0_7 = arith.constant 0 : index
    %7 = vector.load %arg2[%c192, %c0_7] : memref<328x128xf32, #tpu.memory_space<vmem>>, vector<128x128xf32>
    %c320 = arith.constant 320 : index
    %c0_8 = arith.constant 0 : index
    %8 = vector.load %arg2[%c320, %c0_8] : memref<328x128xf32, #tpu.memory_space<vmem>>, vector<1x128xf32>
    %c0_9 = arith.constant 0 : index
    %c0_10 = arith.constant 0 : index
    %9 = vector.load %arg0[%c0_9, %c0_10] : memref<8x16xf32, #tpu.memory_space<vmem>>, vector<8x16xf32>
    %cst = arith.constant dense<0.000000e+00> : vector<8x128xf32>
    %10 = tpu.matmul %9, %0, %cst {dimension_numbers = #tpu.dot_dimension_numbers<[1], [0], [0], [1], [0, 0, 1, 1], [], []>} : vector<8x16xf32>, vector<16x128xf32>, vector<8x128xf32> -> vector<8x128xf32>
    %c0_11 = arith.constant 0 : index
    %c0_12 = arith.constant 0 : index
    %11 = vector.load %arg1[%c0_11, %c0_12] : memref<8x16xf32, #tpu.memory_space<vmem>>, vector<8x16xf32>
    %cst_13 = arith.constant dense<0.000000e+00> : vector<8x128xf32>
    %12 = tpu.matmul %11, %1, %cst_13 {dimension_numbers = #tpu.dot_dimension_numbers<[1], [0], [0], [1], [0, 0, 1, 1], [], []>} : vector<8x16xf32>, vector<16x128xf32>, vector<8x128xf32> -> vector<8x128xf32>
    %13 = arith.addf %10, %12 : vector<8x128xf32>
    %cst_14 = arith.constant dense<0.000000e+00> : vector<128xf32>
    %14 = vector.multi_reduction <add>, %13, %cst_14 [0] : vector<8x128xf32> to vector<128xf32>
    %15 = vector.shape_cast %14 : vector<128xf32> to vector<1x128xf32>
    %cst_15 = arith.constant 8.000000e+00 : f32
    %16 = vector.broadcast %cst_15 : f32 to vector<1x128xf32>
    %17 = arith.divf %15, %16 : vector<1x128xf32>
    %18 = arith.mulf %13, %13 : vector<8x128xf32>
    %cst_16 = arith.constant dense<0.000000e+00> : vector<128xf32>
    %19 = vector.multi_reduction <add>, %18, %cst_16 [0] : vector<8x128xf32> to vector<128xf32>
    %20 = vector.shape_cast %19 : vector<128xf32> to vector<1x128xf32>
    %cst_17 = arith.constant 8.000000e+00 : f32
    %21 = vector.broadcast %cst_17 : f32 to vector<1x128xf32>
    %22 = arith.divf %20, %21 : vector<1x128xf32>
    %23 = arith.mulf %17, %17 : vector<1x128xf32>
    %24 = arith.subf %22, %23 : vector<1x128xf32>
    %cst_18 = arith.constant 0.000000e+00 : f32
    %25 = vector.broadcast %cst_18 : f32 to vector<1x128xf32>
    %26 = arith.maximumf %24, %25 : vector<1x128xf32>
    %cst_19 = arith.constant 9.99999974E-6 : f32
    %27 = vector.broadcast %cst_19 : f32 to vector<1x128xf32>
    %28 = arith.addf %26, %27 : vector<1x128xf32>
    %29 = math.rsqrt %28 : vector<1x128xf32>
    %30 = arith.mulf %2, %29 : vector<1x128xf32>
    %31 = arith.mulf %17, %30 : vector<1x128xf32>
    %32 = arith.subf %3, %31 : vector<1x128xf32>
    %33 = vector.broadcast %30 : vector<1x128xf32> to vector<8x128xf32>
    %34 = arith.mulf %13, %33 : vector<8x128xf32>
    %35 = vector.broadcast %32 : vector<1x128xf32> to vector<8x128xf32>
    %36 = arith.addf %34, %35 : vector<8x128xf32>
    %cst_20 = arith.constant 0.000000e+00 : f32
    %37 = vector.broadcast %cst_20 : f32 to vector<8x128xf32>
    %38 = arith.maximumf %36, %37 : vector<8x128xf32>
    %cst_21 = arith.constant dense<0.000000e+00> : vector<8x128xf32>
    %39 = tpu.matmul %38, %4, %cst_21 {dimension_numbers = #tpu.dot_dimension_numbers<[1], [0], [0], [1], [0, 0, 1, 1], [], []>} : vector<8x128xf32>, vector<128x128xf32>, vector<8x128xf32> -> vector<8x128xf32>
    %cst_22 = arith.constant dense<0.000000e+00> : vector<128xf32>
    %40 = vector.multi_reduction <add>, %39, %cst_22 [0] : vector<8x128xf32> to vector<128xf32>
    %41 = vector.shape_cast %40 : vector<128xf32> to vector<1x128xf32>
    %cst_23 = arith.constant 8.000000e+00 : f32
    %42 = vector.broadcast %cst_23 : f32 to vector<1x128xf32>
    %43 = arith.divf %41, %42 : vector<1x128xf32>
    %44 = arith.mulf %39, %39 : vector<8x128xf32>
    %cst_24 = arith.constant dense<0.000000e+00> : vector<128xf32>
    %45 = vector.multi_reduction <add>, %44, %cst_24 [0] : vector<8x128xf32> to vector<128xf32>
    %46 = vector.shape_cast %45 : vector<128xf32> to vector<1x128xf32>
    %cst_25 = arith.constant 8.000000e+00 : f32
    %47 = vector.broadcast %cst_25 : f32 to vector<1x128xf32>
    %48 = arith.divf %46, %47 : vector<1x128xf32>
    %49 = arith.mulf %43, %43 : vector<1x128xf32>
    %50 = arith.subf %48, %49 : vector<1x128xf32>
    %cst_26 = arith.constant 0.000000e+00 : f32
    %51 = vector.broadcast %cst_26 : f32 to vector<1x128xf32>
    %52 = arith.maximumf %50, %51 : vector<1x128xf32>
    %cst_27 = arith.constant 9.99999974E-6 : f32
    %53 = vector.broadcast %cst_27 : f32 to vector<1x128xf32>
    %54 = arith.addf %52, %53 : vector<1x128xf32>
    %55 = math.rsqrt %54 : vector<1x128xf32>
    %56 = arith.mulf %5, %55 : vector<1x128xf32>
    %57 = arith.mulf %43, %56 : vector<1x128xf32>
    %58 = arith.subf %6, %57 : vector<1x128xf32>
    %59 = vector.broadcast %56 : vector<1x128xf32> to vector<8x128xf32>
    %60 = arith.mulf %39, %59 : vector<8x128xf32>
    %61 = vector.broadcast %58 : vector<1x128xf32> to vector<8x128xf32>
    %62 = arith.addf %60, %61 : vector<8x128xf32>
    %cst_28 = arith.constant 0.000000e+00 : f32
    %63 = vector.broadcast %cst_28 : f32 to vector<8x128xf32>
    %64 = arith.maximumf %62, %63 : vector<8x128xf32>
    %cst_29 = arith.constant dense<0.000000e+00> : vector<8x128xf32>
    %65 = tpu.matmul %64, %7, %cst_29 {dimension_numbers = #tpu.dot_dimension_numbers<[1], [0], [0], [1], [0, 0, 1, 1], [], []>} : vector<8x128xf32>, vector<128x128xf32>, vector<8x128xf32> -> vector<8x128xf32>
    %66 = vector.broadcast %8 : vector<1x128xf32> to vector<8x128xf32>
    %67 = arith.addf %65, %66 : vector<8x128xf32>
    %c0_30 = arith.constant 0 : index
    %c0_31 = arith.constant 0 : index
    %68 = vector.load %arg3[%c0_30, %c0_31] : memref<8x128xf32, #tpu.memory_space<vmem>>, vector<8x128xf32>
    tpu.vector_store %arg3[%c0_30, %c0_31], %67 {strides = array<i32>} : memref<8x128xf32, #tpu.memory_space<vmem>>, vector<8x128xf32>,
    return
  }
}

</mosaic_0001>

<llo_original>
// kernel: tpu_custom_call.1
$region0: #{tpu_custom_call.1}
  #allocation0 [shape = 'u32[]', space=smem, size = 0x4, offset = 0x4, fixed_abs, tag = 'smem constant byte address 0x4 - core index']
  #allocation1 [shape = 'u32[144,128]{1,0:T(1,128)}', space=vmem, size = 0x12000, scoped, tag = 'internal scratch']
  %s0 = inlined_call_operand.hbm [shape: f32[8,16], index: 0, kind: input, shape index: {}]
  %s1 = inlined_call_operand.hbm [shape: f32[8,16], index: 1, kind: input, shape index: {}]
  %s2 = inlined_call_operand.hbm [shape: f32[328,128], index: 2, kind: input, shape index: {}]
  %s3 = inlined_call_operand.hbm [shape: f32[8,128], index: 3, kind: output, shape index: {}]
  %s4 = sld [smem:[#allocation0]]
  $region34: #{tpu_custom_call.1} parent=0
    _
  %s6 = ssub.s32 1, %s4
  %s7 = scalar_select 0, %s6, %s4
  $region1: #{tpu_custom_call.1} parent=0
    #allocation2 [shape = 'u8[4096]{0}', space=vmem, size = 0x1000, scoped, tag = 'input window, operand 0, single buffered']
    #allocation3 [shape = 's32[1]{0}', space=sflag, size = 0x4, scoped, tag = 'scoped memory for tpu_custom_call.1']
    #allocation4 [shape = 's32[1]{0}', space=sflag, size = 0x4, scoped, tag = 'scoped memory for tpu_custom_call.1']
    #allocation5 [shape = 'u8[4096]{0}', space=vmem, size = 0x1000, scoped, tag = 'input window, operand 1, single buffered']
    #allocation6 [shape = 's32[1]{0}', space=sflag, size = 0x4, scoped, tag = 'scoped memory for tpu_custom_call.1']
    #allocation7 [shape = 'u8[167936]{0}', space=vmem, size = 0x29000, scoped, tag = 'input window, operand 2, single buffered']
    #allocation8 [shape = 'u8[4096]{0}', space=vmem, size = 0x1000, scoped, tag = 'output window, operand 0, single buffered']
    %8 = vsyncpa [#allocation3], 0
    %9 = vsyncpa [#allocation6], 0
    %10 = vsyncpa [#allocation4], 0
    // Predicated region
    $region2: #{tpu_custom_call.1} parent=1 // pred_check
      _
    $region3: #{tpu_custom_call.1} parent=1 // pred_check_branch
      %12 = sbr.rel (0) target = $region5
    $region4: #{tpu_custom_call.1} parent=1 // pred_region
      %s14 = ssub.s32 128, 128
      %15 = vsyncadd [#allocation3], %s14
      %s17 = sshll.u32 [#allocation2], 4
      %s18 = int_to_ptr.vmem [resolvable:$true] %s17
      %20 = dma.hbm_to_vmem [thread:$0]  %s0, 128, %s18, [#allocation3]
    $region5: #{tpu_custom_call.1} parent=1 // pred_fallthru
      _
    // Predicated region
    $region6: #{tpu_custom_call.1} parent=1 // pred_check
      _
    $region7: #{tpu_custom_call.1} parent=1 // pred_check_branch
      %22 = sbr.rel (0) target = $region9
    $region8: #{tpu_custom_call.1} parent=1 // pred_region
      %s24 = ssub.s32 128, 128
      %25 = vsyncadd [#allocation6], %s24
      %s27 = sshll.u32 [#allocation5], 4
      %s28 = int_to_ptr.vmem [resolvable:$true] %s27
      %30 = dma.hbm_to_vmem [thread:$0]  %s1, 128, %s28, [#allocation6]
    $region9: #{tpu_custom_call.1} parent=1 // pred_fallthru
      _
    // Predicated region
    $region10: #{tpu_custom_call.1} parent=1 // pred_check
      _
    $region11: #{tpu_custom_call.1} parent=1 // pred_check_branch
      %32 = sbr.rel (0) target = $region13
    $region12: #{tpu_custom_call.1} parent=1 // pred_region
      %s34 = ssub.s32 5248, 5248
      %35 = vsyncadd [#allocation6], %s34
      %s36 = sshll.u32 [#allocation7], 4
      %s37 = int_to_ptr.vmem [resolvable:$true] %s36
      %42 = dma.hbm_to_vmem [thread:$0]  %s2, 5248, %s37, [#allocation6], 128, 128, 8
    $region13: #{tpu_custom_call.1} parent=1 // pred_fallthru
      _
    // Predicated region
    $region14: #{tpu_custom_call.1} parent=1 // pred_check
      _
    $region15: #{tpu_custom_call.1} parent=1 // pred_check_branch
      %44 = sbr.rel (0) target = $region17
    $region16: #{tpu_custom_call.1} parent=1 // pred_region
      %45 = dma.done [#allocation3], 128
    $region17: #{tpu_custom_call.1} parent=1 // pred_fallthru
      _
    // Predicated region
    $region18: #{tpu_custom_call.1} parent=1 // pred_check
      _
    $region19: #{tpu_custom_call.1} parent=1 // pred_check_branch
      %47 = sbr.rel (0) target = $region21
    $region20: #{tpu_custom_call.1} parent=1 // pred_region
      %48 = dma.done [#allocation6], 128
    $region21: #{tpu_custom_call.1} parent=1 // pred_fallthru
      _
    // Predicated region
    $region22: #{tpu_custom_call.1} parent=1 // pred_check
      _
    $region23: #{tpu_custom_call.1} parent=1 // pred_check_branch
      %50 = sbr.rel (0) target = $region25
    $region24: #{tpu_custom_call.1} parent=1 // pred_region
      %51 = dma.done [#allocation6], 5248
    $region25: #{tpu_custom_call.1} parent=1 // pred_fallthru
      _
    %v52 = vld [vmem:[#allocation7] sm:$0xff]
    %v53 = vld [vmem:[#allocation7 + $0x8] sm:$0xff]
    %v54 = vld [vmem:[#allocation7 + $0x10] sm:$0xff]
    %v55 = vld [vmem:[#allocation7 + $0x18] sm:$0xff]
    %v56 = vld [vmem:[#allocation7 + $0x20] sm:$0x1]
    %v57 = vld [vmem:[#allocation7 + $0x28] sm:$0x1]
    %v58 = vld [vmem:[#allocation7 + $0x30] sm:$0xff]
    %v59 = vld [vmem:[#allocation7 + $0x38] sm:$0xff]
    %v60 = vld [vmem:[#allocation7 + $0x40] sm:$0xff]
    %v61 = vld [vmem:[#allocation7 + $0x48] sm:$0xff]
    %v62 = vld [vmem:[#allocation7 + $0x50] sm:$0xff]
    %v63 = vld [vmem:[#allocation7 + $0x58] sm:$0xff]
    %v64 = vld [vmem:[#allocation7 + $0x60] sm:$0xff]
    %v65 = vld [vmem:[#allocation7 + $0x68] sm:$0xff]
    %v66 = vld [vmem:[#allocation7 + $0x70] sm:$0xff]
    %v67 = vld [vmem:[#allocation7 + $0x78] sm:$0xff]
    %v68 = vld [vmem:[#allocation7 + $0x80] sm:$0xff]
    %v69 = vld [vmem:[#allocation7 + $0x88] sm:$0xff]
    %v70 = vld [vmem:[#allocation7 + $0x90] sm:$0xff]
    %v71 = vld [vmem:[#allocation7 + $0x98] sm:$0xff]
    %v72 = vld [vmem:[#allocation7 + $0xa0] sm:$0xff]
    %v73 = vld [vmem:[#allocation7 + $0xa8] sm:$0xff]
    %v74 = vld [vmem:[#allocation7 + $0xb0] sm:$0x1]
    %v75 = vld [vmem:[#allocation7 + $0xb8] sm:$0x1]
    %v76 = vld [vmem:[#allocation7 + $0xc0] sm:$0xff]
    %v77 = vld [vmem:[#allocation7 + $0xc8] sm:$0xff]
    %v78 = vld [vmem:[#allocation7 + $0xd0] sm:$0xff]
    %v79 = vld [vmem:[#allocation7 + $0xd8] sm:$0xff]
    %v80 = vld [vmem:[#allocation7 + $0xe0] sm:$0xff]
    %v81 = vld [vmem:[#allocation7 + $0xe8] sm:$0xff]
    %v82 = vld [vmem:[#allocation7 + $0xf0] sm:$0xff]
    %v83 = vld [vmem:[#allocation7 + $0xf8] sm:$0xff]
    %v84 = vld [vmem:[#allocation7 + $0x100] sm:$0xff]
    %v85 = vld [vmem:[#allocation7 + $0x108] sm:$0xff]
    %v86 = vld [vmem:[#allocation7 + $0x110] sm:$0xff]
    %v87 = vld [vmem:[#allocation7 + $0x118] sm:$0xff]
    %v88 = vld [vmem:[#allocation7 + $0x120] sm:$0xff]
    %v89 = vld [vmem:[#allocation7 + $0x128] sm:$0xff]
    %v90 = vld [vmem:[#allocation7 + $0x130] sm:$0xff]
    %v91 = vld [vmem:[#allocation7 + $0x138] sm:$0xff]
    %v92 = vld [vmem:[#allocation7 + $0x140] sm:$0x1]
    %v93 = vld [vmem:[#allocation2] sm:$0xff]
    %v94 = vld [vmem:[#allocation5] sm:$0xff]
    %vm95 = vcmask 130048
    %v97 = vsel %vm95, %v94, 0
    %99 = vmatprep.subr.mxu0 0.0
    %100 = vmatpush1.msra.mxu0 0.0
    %101 = vmatprep.subr.mxu0 0.0
    %102 = vmatpush1.msra.mxu0 0.0
    %103 = vmatprep.subr.mxu0 0.0
    %104 = vmatpush1.msra.mxu0 0.0
    %105 = vmatprep.subr.mxu0 0.0
    %106 = vmatpush1.msra.mxu0 0.0
    %107 = vmatprep.subr.mxu0 0.0
    %108 = vmatpush1.msra.mxu0 0.0
    %109 = vmatprep.subr.mxu0 0.0
    %110 = vmatpush1.msra.mxu0 0.0
    %111 = vmatprep.subr.mxu0 0.0
    %112 = vmatpush1.msra.mxu0 0.0
    %113 = vmatprep.subr.mxu0 0.0
    %114 = vmatpush1.msra.mxu0 0.0
    %115 = vmatprep.subr.mxu0 0.0
    %116 = vmatpush1.msra.mxu0 0.0
    %117 = vmatprep.subr.mxu0 0.0
    %118 = vmatpush1.msra.mxu0 0.0
    %119 = vmatprep.subr.mxu0 0.0
    %120 = vmatpush1.msra.mxu0 0.0
    %121 = vmatprep.subr.mxu0 0.0
    %122 = vmatpush1.msra.mxu0 0.0
    %123 = vmatprep.subr.mxu0 0.0
    %124 = vmatpush1.msra.mxu0 0.0
    %125 = vmatprep.subr.mxu0 0.0
    %126 = vmatpush1.msra.mxu0 0.0
    %127 = vmatprep.subr.mxu0 0.0
    %128 = vmatpush1.msra.mxu0 %v55
    %129 = vmatprep.subr.mxu0 0.0
    %130 = vmatpush1.msra.mxu0 %v54
    %131 = vmatprep.subr.mxu0 0.0
    %132 = vmatpush2.msra.mxu0 0.0
    %133 = vmatprep.subr.mxu0 0.0
    %134 = vmatpush2.msra.mxu0 0.0
    %135 = vmatprep.subr.mxu0 0.0
    %136 = vmatpush2.msra.mxu0 0.0
    %137 = vmatprep.subr.mxu0 0.0
    %138 = vmatpush2.msra.mxu0 0.0
    %139 = vmatprep.subr.mxu0 0.0
    %140 = vmatpush2.msra.mxu0 0.0
    %141 = vmatprep.subr.mxu0 0.0
    %142 = vmatpush2.msra.mxu0 0.0
    %143 = vmatprep.subr.mxu0 0.0
    %144 = vmatpush2.msra.mxu0 0.0
    %145 = vmatprep.subr.mxu0 0.0
    %146 = vmatpush2.msra.mxu0 0.0
    %147 = vmatprep.subr.mxu0 0.0
    %148 = vmatpush2.msra.mxu0 0.0
    %149 = vmatprep.subr.mxu0 0.0
    %150 = vmatpush2.msra.mxu0 0.0
    %151 = vmatprep.subr.mxu0 0.0
    %152 = vmatpush2.msra.mxu0 0.0
    %153 = vmatprep.subr.mxu0 0.0
    %154 = vmatpush2.msra.mxu0 0.0
    %155 = vmatprep.subr.mxu0 0.0
    %156 = vmatpush2.msra.mxu0 0.0
    %157 = vmatprep.subr.mxu0 0.0
    %158 = vmatpush2.msra.mxu0 0.0
    %159 = vmatprep.subr.mxu0 0.0
    %160 = vmatpush2.msra.mxu0 0.0
    %161 = vmatprep.subr.mxu0 0.0
    %162 = vmatpush2.msra.mxu0 0.0
    %163 = vmatprep.mubr.f32.mxu0 0.0
    %164 = vmatmul.mubr.f32.gmra.mxu0 %v97
    %v165 = vpop.f32.mrf.mxu0
    %v166 = vadd.f32 0.0, %v165
    %v167 = vpop.f32.mrf.mxu0
    %168 = vdwg.mxu0
    %v170 = vsel %vm95, %v93, 0
    %172 = vmatprep.subr.mxu0 0.0
    %173 = vmatpush1.msra.mxu0 0.0
    %174 = vmatprep.subr.mxu0 0.0
    %175 = vmatpush1.msra.mxu0 0.0
    %176 = vmatprep.subr.mxu0 0.0
    %177 = vmatpush1.msra.mxu0 0.0
    %178 = vmatprep.subr.mxu0 0.0
    %179 = vmatpush1.msra.mxu0 0.0
    %180 = vmatprep.subr.mxu0 0.0
    %181 = vmatpush1.msra.mxu0 0.0
    %182 = vmatprep.subr.mxu0 0.0
    %183 = vmatpush1.msra.mxu0 0.0
    %184 = vmatprep.subr.mxu0 0.0
    %185 = vmatpush1.msra.mxu0 0.0
    %186 = vmatprep.subr.mxu0 0.0
    %187 = vmatpush1.msra.mxu0 0.0
    %188 = vmatprep.subr.mxu0 0.0
    %189 = vmatpush1.msra.mxu0 0.0
    %190 = vmatprep.subr.mxu0 0.0
    %191 = vmatpush1.msra.mxu0 0.0
    %192 = vmatprep.subr.mxu0 0.0
    %193 = vmatpush1.msra.mxu0 0.0
    %194 = vmatprep.subr.mxu0 0.0
    %195 = vmatpush1.msra.mxu0 0.0
    %196 = vmatprep.subr.mxu0 0.0
    %197 = vmatpush1.msra.mxu0 0.0
    %198 = vmatprep.subr.mxu0 0.0
    %199 = vmatpush1.msra.mxu0 0.0
    %200 = vmatprep.subr.mxu0 0.0
    %201 = vmatpush1.msra.mxu0 %v53
    %202 = vmatprep.subr.mxu0 0.0
    %203 = vmatpush1.msra.mxu0 %v52
    %204 = vmatprep.subr.mxu0 0.0
    %205 = vmatpush2.msra.mxu0 0.0
    %206 = vmatprep.subr.mxu0 0.0
    %207 = vmatpush2.msra.mxu0 0.0
    %208 = vmatprep.subr.mxu0 0.0
    %209 = vmatpush2.msra.mxu0 0.0
    %210 = vmatprep.subr.mxu0 0.0
    %211 = vmatpush2.msra.mxu0 0.0
    %212 = vmatprep.subr.mxu0 0.0
    %213 = vmatpush2.msra.mxu0 0.0
    %214 = vmatprep.subr.mxu0 0.0
    %215 = vmatpush2.msra.mxu0 0.0
    %216 = vmatprep.subr.mxu0 0.0
    %217 = vmatpush2.msra.mxu0 0.0
    %218 = vmatprep.subr.mxu0 0.0
    %219 = vmatpush2.msra.mxu0 0.0
    %220 = vmatprep.subr.mxu0 0.0
    %221 = vmatpush2.msra.mxu0 0.0
    %222 = vmatprep.subr.mxu0 0.0
    %223 = vmatpush2.msra.mxu0 0.0
    %224 = vmatprep.subr.mxu0 0.0
    %225 = vmatpush2.msra.mxu0 0.0
    %226 = vmatprep.subr.mxu0 0.0
    %227 = vmatpush2.msra.mxu0 0.0
    %228 = vmatprep.subr.mxu0 0.0
    %229 = vmatpush2.msra.mxu0 0.0
    %230 = vmatprep.subr.mxu0 0.0
    %231 = vmatpush2.msra.mxu0 0.0
    %232 = vmatprep.subr.mxu0 0.0
    %233 = vmatpush2.msra.mxu0 0.0
    %234 = vmatprep.subr.mxu0 0.0
    %235 = vmatpush2.msra.mxu0 0.0
    %236 = vmatprep.mubr.f32.mxu0 0.0
    %237 = vmatmul.mubr.f32.gmra.mxu0 %v170
    %v238 = vpop.f32.mrf.mxu0
    %v239 = vadd.f32 %v166, %v238
    %v240 = vpop.f32.mrf.mxu0
    %241 = vdwg.mxu0
    %v242 = vrot.slane %v239, 4
    %v243 = vadd.f32 %v239, %v242
    %v244 = vrot.slane %v243, 2
    %v245 = vadd.f32 %v243, %v244
    %v246 = vrot.slane %v245, 1
    %v247 = vadd.f32 %v245, %v246
    %v248 = vrcp.pop 8.0
    %v249 = vmul.f32 %v247, %v248
    %v250 = vmul.f32 %v239, %v239
    %v251 = vrot.slane %v250, 4
    %v252 = vadd.f32 %v250, %v251
    %v253 = vrot.slane %v252, 2
    %v254 = vadd.f32 %v252, %v253
    %v255 = vrot.slane %v254, 1
    %v256 = vadd.f32 %v254, %v255
    %v257 = vmul.f32 %v256, %v248
    %v258 = vmul.f32 %v249, %v249
    %v259 = vsub.f32 %v257, %v258
    %v260 = vmax.f32 %v259, 0.0
    %v261 = vadd.f32 %v260, 1e-05
    %v262 = vrsqrt.pop %v261
    %v263 = vmul.f32 %v56, %v262
    %v264 = vmul.f32 %v249, %v263
    %v265 = vsub.f32 %v57, %v264
    %v266 = vlaneseq
    %v267 = vshrl.u32 %v266, 7
    %v268 = vsub.s32 0, %v267
    %v269 = vrot.slane %v263, %v268
    %v270 = vmul.f32 %v239, %v269
    %v271 = vlaneseq
    %v272 = vshrl.u32 %v271, 7
    %v273 = vsub.s32 0, %v272
    %v274 = vrot.slane %v265, %v273
    %v275 = vadd.f32 %v270, %v274
    %v276 = vmax.f32 %v275, 0.0
    %277 = vmatprep.subr.mxu0 0.0
    %278 = vmatpush1.msra.mxu0 %v73
    %279 = vmatprep.subr.mxu0 0.0
    %280 = vmatpush1.msra.mxu0 %v72
    %281 = vmatprep.subr.mxu0 0.0
    %282 = vmatpush1.msra.mxu0 %v71
    %283 = vmatprep.subr.mxu0 0.0
    %284 = vmatpush1.msra.mxu0 %v70
    %285 = vmatprep.subr.mxu0 0.0
    %286 = vmatpush1.msra.mxu0 %v69
    %287 = vmatprep.subr.mxu0 0.0
    %288 = vmatpush1.msra.mxu0 %v68
    %289 = vmatprep.subr.mxu0 0.0
    %290 = vmatpush1.msra.mxu0 %v67
    %291 = vmatprep.subr.mxu0 0.0
    %292 = vmatpush1.msra.mxu0 %v66
    %293 = vmatprep.subr.mxu0 0.0
    %294 = vmatpush1.msra.mxu0 %v65
    %295 = vmatprep.subr.mxu0 0.0
    %296 = vmatpush1.msra.mxu0 %v64
    %297 = vmatprep.subr.mxu0 0.0
    %298 = vmatpush1.msra.mxu0 %v63
    %299 = vmatprep.subr.mxu0 0.0
    %300 = vmatpush1.msra.mxu0 %v62
    %301 = vmatprep.subr.mxu0 0.0
    %302 = vmatpush1.msra.mxu0 %v61
    %303 = vmatprep.subr.mxu0 0.0
    %304 = vmatpush1.msra.mxu0 %v60
    %305 = vmatprep.subr.mxu0 0.0
    %306 = vmatpush1.msra.mxu0 %v59
    %307 = vmatprep.subr.mxu0 0.0
    %308 = vmatpush1.msra.mxu0 %v58
    %309 = vmatprep.subr.mxu0 0.0
    %310 = vmatpush2.msra.mxu0 0.0
    %311 = vmatprep.subr.mxu0 0.0
    %312 = vmatpush2.msra.mxu0 0.0
    %313 = vmatprep.subr.mxu0 0.0
    %314 = vmatpush2.msra.mxu0 0.0
    %315 = vmatprep.subr.mxu0 0.0
    %316 = vmatpush2.msra.mxu0 0.0
    %317 = vmatprep.subr.mxu0 0.0
    %318 = vmatpush2.msra.mxu0 0.0
    %319 = vmatprep.subr.mxu0 0.0
    %320 = vmatpush2.msra.mxu0 0.0
    %321 = vmatprep.subr.mxu0 0.0
    %322 = vmatpush2.msra.mxu0 0.0
    %323 = vmatprep.subr.mxu0 0.0
    %324 = vmatpush2.msra.mxu0 0.0
    %325 = vmatprep.subr.mxu0 0.0
    %326 = vmatpush2.msra.mxu0 0.0
    %327 = vmatprep.subr.mxu0 0.0
    %328 = vmatpush2.msra.mxu0 0.0
    %329 = vmatprep.subr.mxu0 0.0
    %330 = vmatpush2.msra.mxu0 0.0
    %331 = vmatprep.subr.mxu0 0.0
    %332 = vmatpush2.msra.mxu0 0.0
    %333 = vmatprep.subr.mxu0 0.0
    %334 = vmatpush2.msra.mxu0 0.0
    %335 = vmatprep.subr.mxu0 0.0
    %336 = vmatpush2.msra.mxu0 0.0
    %337 = vmatprep.subr.mxu0 0.0
    %338 = vmatpush2.msra.mxu0 0.0
    %339 = vmatprep.subr.mxu0 0.0
    %340 = vmatpush2.msra.mxu0 0.0
    %341 = vmatprep.mubr.f32.mxu0 0.0
    %342 = vmatmul.mubr.f32.gmra.mxu0 %v276
    %v343 = vpop.f32.mrf.mxu0
    %v344 = vadd.f32 0.0, %v343
    %v345 = vpop.f32.mrf.mxu0
    %346 = vdwg.mxu0
    %v347 = vrot.slane %v344, 4
    %v348 = vadd.f32 %v344, %v347
    %v349 = vrot.slane %v348, 2
    %v350 = vadd.f32 %v348, %v349
    %v351 = vrot.slane %v350, 1
    %v352 = vadd.f32 %v350, %v351
    %v353 = vmul.f32 %v352, %v248
    %v354 = vmul.f32 %v344, %v344
    %v355 = vrot.slane %v354, 4
    %v356 = vadd.f32 %v354, %v355
    %v357 = vrot.slane %v356, 2
    %v358 = vadd.f32 %v356, %v357
    %v359 = vrot.slane %v358, 1
    %v360 = vadd.f32 %v358, %v359
    %v361 = vmul.f32 %v360, %v248
    %v362 = vmul.f32 %v353, %v353
    %v363 = vsub.f32 %v361, %v362
    %v364 = vmax.f32 %v363, 0.0
    %v365 = vadd.f32 %v364, 1e-05
    %v366 = vrsqrt.pop %v365
    %v367 = vmul.f32 %v74, %v366
    %v368 = vmul.f32 %v353, %v367
    %v369 = vsub.f32 %v75, %v368
    %v370 = vlaneseq
    %v371 = vshrl.u32 %v370, 7
    %v372 = vsub.s32 0, %v371
    %v373 = vrot.slane %v367, %v372
    %v374 = vmul.f32 %v344, %v373
    %v375 = vlaneseq
    %v376 = vshrl.u32 %v375, 7
    %v377 = vsub.s32 0, %v376
    %v378 = vrot.slane %v369, %v377
    %v379 = vadd.f32 %v374, %v378
    %v380 = vmax.f32 %v379, 0.0
    %v381 = vlaneseq
    %v382 = vshrl.u32 %v381, 7
    %v383 = vsub.s32 0, %v382
    %v384 = vrot.slane %v92, %v383
    %385 = vmatprep.subr.mxu0 0.0
    %386 = vmatpush1.msra.mxu0 %v91
    %387 = vmatprep.subr.mxu0 0.0
    %388 = vmatpush1.msra.mxu0 %v90
    %389 = vmatprep.subr.mxu0 0.0
    %390 = vmatpush1.msra.mxu0 %v89
    %391 = vmatprep.subr.mxu0 0.0
    %392 = vmatpush1.msra.mxu0 %v88
    %393 = vmatprep.subr.mxu0 0.0
    %394 = vmatpush1.msra.mxu0 %v87
    %395 = vmatprep.subr.mxu0 0.0
    %396 = vmatpush1.msra.mxu0 %v86
    %397 = vmatprep.subr.mxu0 0.0
    %398 = vmatpush1.msra.mxu0 %v85
    %399 = vmatprep.subr.mxu0 0.0
    %400 = vmatpush1.msra.mxu0 %v84
    %401 = vmatprep.subr.mxu0 0.0
    %402 = vmatpush1.msra.mxu0 %v83
    %403 = vmatprep.subr.mxu0 0.0
    %404 = vmatpush1.msra.mxu0 %v82
    %405 = vmatprep.subr.mxu0 0.0
    %406 = vmatpush1.msra.mxu0 %v81
    %407 = vmatprep.subr.mxu0 0.0
    %408 = vmatpush1.msra.mxu0 %v80
    %409 = vmatprep.subr.mxu0 0.0
    %410 = vmatpush1.msra.mxu0 %v79
    %411 = vmatprep.subr.mxu0 0.0
    %412 = vmatpush1.msra.mxu0 %v78
    %413 = vmatprep.subr.mxu0 0.0
    %414 = vmatpush1.msra.mxu0 %v77
    %415 = vmatprep.subr.mxu0 0.0
    %416 = vmatpush1.msra.mxu0 %v76
    %417 = vmatprep.subr.mxu0 0.0
    %418 = vmatpush2.msra.mxu0 0.0
    %419 = vmatprep.subr.mxu0 0.0
    %420 = vmatpush2.msra.mxu0 0.0
    %421 = vmatprep.subr.mxu0 0.0
    %422 = vmatpush2.msra.mxu0 0.0
    %423 = vmatprep.subr.mxu0 0.0
    %424 = vmatpush2.msra.mxu0 0.0
    %425 = vmatprep.subr.mxu0 0.0
    %426 = vmatpush2.msra.mxu0 0.0
    %427 = vmatprep.subr.mxu0 0.0
    %428 = vmatpush2.msra.mxu0 0.0
    %429 = vmatprep.subr.mxu0 0.0
    %430 = vmatpush2.msra.mxu0 0.0
    %431 = vmatprep.subr.mxu0 0.0
    %432 = vmatpush2.msra.mxu0 0.0
    %433 = vmatprep.subr.mxu0 0.0
    %434 = vmatpush2.msra.mxu0 0.0
    %435 = vmatprep.subr.mxu0 0.0
    %436 = vmatpush2.msra.mxu0 0.0
    %437 = vmatprep.subr.mxu0 0.0
    %438 = vmatpush2.msra.mxu0 0.0
    %439 = vmatprep.subr.mxu0 0.0
    %440 = vmatpush2.msra.mxu0 0.0
    %441 = vmatprep.subr.mxu0 0.0
    %442 = vmatpush2.msra.mxu0 0.0
    %443 = vmatprep.subr.mxu0 0.0
    %444 = vmatpush2.msra.mxu0 0.0
    %445 = vmatprep.subr.mxu0 0.0
    %446 = vmatpush2.msra.mxu0 0.0
    %447 = vmatprep.subr.mxu0 0.0
    %448 = vmatpush2.msra.mxu0 0.0
    %449 = vmatprep.mubr.f32.mxu0 0.0
    %450 = vmatmul.mubr.f32.gmra.mxu0 %v380
    %v451 = vpop.f32.mrf.mxu0
    %v452 = vadd.f32 %v384, %v451
    %v453 = vpop.f32.mrf.mxu0
    %454 = vdwg.mxu0
    %455 = vst [vmem:[#allocation8] sm:$0xff] %v452
    // Predicated region
    $region26: #{tpu_custom_call.1} parent=1 // pred_check
      _
    $region27: #{tpu_custom_call.1} parent=1 // pred_check_branch
      %457 = sbr.rel (0) target = $region29
    $region28: #{tpu_custom_call.1} parent=1 // pred_region
      %s459 = ssub.s32 128, 128
      %460 = vsyncadd [#allocation4], %s459
      %s462 = sshll.u32 [#allocation8], 4
      %s463 = int_to_ptr.vmem [resolvable:$true] %s462
      %465 = dma.vmem_to_hbm [thread:$0]  %s463, 128, %s3, [#allocation4]
    $region29: #{tpu_custom_call.1} parent=1 // pred_fallthru
      _
    // Predicated region
    $region30: #{tpu_custom_call.1} parent=1 // pred_check
      _
    $region31: #{tpu_custom_call.1} parent=1 // pred_check_branch
      %467 = sbr.rel (0) target = $region33
    $region32: #{tpu_custom_call.1} parent=1 // pred_region
      %468 = dma.done [#allocation4], 128
    $region33: #{tpu_custom_call.1} parent=1 // pred_fallthru
      _
    %469 = vsyncpa [#allocation3], 1
    %470 = vsyncpa [#allocation6], 1
    %471 = vsyncpa [#allocation4], 1

</llo_original>
